<compile_context>
chip_gen: v6e
topology: v6e:2x2x1
jax: 0.10.0
libtpu: 0.0.40
codegen_flags: <defaults>
</compile_context>

<pallas_src>
import jax
import jax.numpy as jnp
from jax.experimental import pallas as pl
from jax.experimental.pallas import tpu as pltpu

_LANES = 128
_RAGGED_SINGLE_BLOCK_BYTES = 2 * 1024 * 1024  # cap for the ragged 1-block path


def _factor_multiply_kernel(f_ref, x_ref, o_ref):
    # Pure VPU elementwise multiply; f_ref is a (1,) float32 scalar in SMEM.
    o_ref[...] = (x_ref[...] * f_ref[0]).astype(o_ref.dtype)


def _sublane_multiple(dtype) -> int:
    # Packed sublane tiling: (8,128) 32-bit, (16,128) 16-bit, (32,128) 8-bit.
    itemsize = jnp.dtype(dtype).itemsize
    if itemsize >= 4:
        return 8
    if itemsize == 2:
        return 16
    return 32


def _target_block_bytes() -> int:
    # Generation-aware per-operand block budget. Double-buffered in+out:
    #   v5e: 2 MiB ->  8 MiB resident (16 MiB default scoped VMEM)
    #   v6e: 4 MiB -> 16 MiB resident (32 MiB default scoped VMEM)
    #   v7x: 6 MiB -> 24 MiB resident (32 MiB default scoped VMEM)
    try:
        kind = jax.devices()[0].device_kind.lower()
    except Exception:  # defensive: fall back to the most conservative budget
        kind = ""
    if "v7" in kind:
        return 6 * 1024 * 1024
    if "v6" in kind:
        return 4 * 1024 * 1024
    return 2 * 1024 * 1024


def _smem_factor_spec():
    # Whole (1,) factor array lives in SMEM; scalar read is ~free.
    return pl.BlockSpec(memory_space=pltpu.MemorySpace.SMEM)


def _run_tiled(x2d, f_arr, out_dtype):
    """Tiled kernel over a lane-dense (rows, 128) slab."""
    rows = x2d.shape[0]
    in_item = jnp.dtype(x2d.dtype).itemsize
    out_item = jnp.dtype(out_dtype).itemsize
    item = max(in_item, out_item)
    sub = max(_sublane_multiple(x2d.dtype), _sublane_multiple(out_dtype))

    tile_rows = (_target_block_bytes() // (_LANES * item)) // sub * sub
    tile_rows = max(sub, tile_rows)
    # Guarantee >=2 grid steps whenever the slab is splittable so the
    # "parallel" axis can actually shard across both v7x TensorCores.
    if rows > 2 * sub:
        half_rows = pl.cdiv(pl.cdiv(rows, 2), sub) * sub
        tile_rows = min(tile_rows, half_rows)
    tile_rows = max(sub, min(tile_rows, pl.cdiv(rows, sub) * sub))
    grid = (pl.cdiv(rows, tile_rows),)  # Pallas clips the partial last block

    total = rows * _LANES
    return pl.pallas_call(
        _factor_multiply_kernel,
        out_shape=jax.ShapeDtypeStruct((rows, _LANES), out_dtype),
        grid_spec=pltpu.PrefetchScalarGridSpec(
            num_scalar_prefetch=0,
            grid=grid,
            in_specs=[
                _smem_factor_spec(),
                pl.BlockSpec((tile_rows, _LANES), lambda i: (i, 0)),
            ],
            out_specs=pl.BlockSpec((tile_rows, _LANES), lambda i: (i, 0)),
        ),
        compiler_params=pltpu.CompilerParams(
            dimension_semantics=("parallel",),  # megacore shard on v7x
        ),
        cost_estimate=pl.CostEstimate(
            flops=total,
            transcendentals=0,
            bytes_accessed=total * (in_item + out_item),
        ),
    )(f_arr, x2d)


def _run_single_block_1d(x_flat, f_arr, out_dtype):
    """Whole (ragged) array as one full-extent 1-D block — no padding needed."""
    n = x_flat.shape[0]
    in_item = jnp.dtype(x_flat.dtype).itemsize
    out_item = jnp.dtype(out_dtype).itemsize
    return pl.pallas_call(
        _factor_multiply_kernel,
        out_shape=jax.ShapeDtypeStruct((n,), out_dtype),
        grid_spec=pltpu.PrefetchScalarGridSpec(
            num_scalar_prefetch=0,
            grid=(1,),
            in_specs=[
                _smem_factor_spec(),
                pl.BlockSpec((n,), lambda i: (0,)),
            ],
            out_specs=pl.BlockSpec((n,), lambda i: (0,)),
        ),
        compiler_params=pltpu.CompilerParams(
            dimension_semantics=("arbitrary",),
        ),
        cost_estimate=pl.CostEstimate(
            flops=n, transcendentals=0,
            bytes_accessed=n * (in_item + out_item),
        ),
    )(f_arr, x_flat)


def factor_multiply(x: jax.Array, factor) -> jax.Array:
    """Elementwise `x * factor` via Pallas TPU kernels (any shape / size).

    `factor` may be a Python scalar or a traced JAX scalar (e.g. a parameter);
    it is passed to the kernel as an SMEM operand, so no recompile per value.
    """
    orig_shape = x.shape
    total = x.size
    # PyTorch-style promotion: float x keeps its dtype (python float is weak);
    # int x * float factor promotes to float32.
    out_dtype = jnp.result_type(x.dtype, factor)
    f_arr = jnp.asarray(factor, dtype=jnp.float32).reshape((1,))

    if total == 0:
        return jnp.zeros(orig_shape, dtype=out_dtype)

    if total % _LANES == 0:
        # Common path (typical NCHW activations): free bitcast-reshape to a
        # lane-dense (rows, 128) slab — no extra HBM pass.
        out2d = _run_tiled(x.reshape(total // _LANES, _LANES), f_arr, out_dtype)
        return out2d.reshape(orig_shape)

    # Ragged path: no pad / slice round-trips through HBM.
    flat = x.reshape(-1)
    item = max(jnp.dtype(x.dtype).itemsize, jnp.dtype(out_dtype).itemsize)
    split = (total // _LANES) * _LANES
    if split == 0 or total * item <= _RAGGED_SINGLE_BLOCK_BYTES:
        out_flat = _run_single_block_1d(flat, f_arr, out_dtype)
        return out_flat.reshape(orig_shape)

    # Large ragged array: aligned prefix through the tiled kernel, the
    # (<128-element) tail through a tiny plain-JAX op.
    head = _run_tiled(flat[:split].reshape(split // _LANES, _LANES),
                      f_arr, out_dtype)
    tail = (flat[split:].astype(jnp.float32) * f_arr[0]).astype(out_dtype)
    out_flat = jnp.concatenate([head.reshape(-1), tail])
    return out_flat.reshape(orig_shape)


if __name__ == "__main__":
    key = jax.random.PRNGKey(0)
    # Small NCHW-like input consistent with the module's usage.
    x = jax.random.normal(key, (2, 4, 16, 16), dtype=jnp.float32)
    factor = 0.5  # the module's __init__ "parameter"

    out = factor_multiply(x, factor)
    out = jax.block_until_ready(out)

    # Correctness check against plain JAX reference.
    ref = x * factor
    assert out.shape == x.shape and out.dtype == ref.dtype
    assert jnp.allclose(out, ref, atol=1e-6, rtol=1e-6)

    print("KERNEL_OK")
</pallas_src>

<mosaic_0001>
module attributes {stable_mosaic.version = 11 : i64} {
  func.func @_factor_multiply_kernel(%arg0: i32, %arg1: memref<1xf32, #tpu.memory_space<smem>>, %arg2: memref<16x128xf32, #tpu.memory_space<vmem>>, %arg3: memref<16x128xf32, #tpu.memory_space<vmem>>) attributes {dimension_semantics = [#tpu.dimension_semantics<parallel>], iteration_bounds = array<i64: 1>, scalar_prefetch = 0 : i64, scratch_operands = 0 : i64, tpu.core_type = #tpu.core_type<tc>, window_params = [{transform_indices = @transform_0, window_bounds = array<i64: 1>}, {transform_indices = @transform_1, window_bounds = array<i64: 16, 128>}, {transform_indices = @transform_2, window_bounds = array<i64: 16, 128>}]} {
    %c0 = arith.constant 0 : index
    %c0_0 = arith.constant 0 : index
    %0 = vector.load %arg2[%c0, %c0_0] : memref<16x128xf32, #tpu.memory_space<vmem>>, vector<16x128xf32>
    %c0_1 = arith.constant 0 : index
    %1 = memref.load %arg1[%c0_1] : memref<1xf32, #tpu.memory_space<smem>>
    %2 = vector.broadcast %1 : f32 to vector<16x128xf32>
    %3 = arith.mulf %0, %2 : vector<16x128xf32>
    %c0_2 = arith.constant 0 : index
    %c0_3 = arith.constant 0 : index
    %4 = vector.load %arg3[%c0_2, %c0_3] : memref<16x128xf32, #tpu.memory_space<vmem>>, vector<16x128xf32>
    tpu.vector_store %arg3[%c0_2, %c0_3], %3 {strides = array<i32>} : memref<16x128xf32, #tpu.memory_space<vmem>>, vector<16x128xf32>,
    return
  }
  func.func @transform_0(%arg0: i32) -> i32 {
    %c0_i32 = arith.constant 0 : i32
    %c0_i32_0 = arith.constant 0 : i32
    return %c0_i32 : i32
  }
  func.func @transform_1(%arg0: i32) -> (i32, i32) {
    %c0_i32 = arith.constant 0 : i32
    %c0_i32_0 = arith.constant 0 : i32
    return %arg0, %c0_i32 : i32, i32
  }
  func.func @transform_2(%arg0: i32) -> (i32, i32) {
    %c0_i32 = arith.constant 0 : i32
    %c0_i32_0 = arith.constant 0 : i32
    return %arg0, %c0_i32 : i32, i32
  }
}

</mosaic_0001>

<llo_original>
// kernel: tpu_custom_call.1
$region0: #{tpu_custom_call.1}
  #allocation0 [shape = 'u32[]', space=smem, size = 0x4, offset = 0x4, fixed_abs, tag = 'smem constant byte address 0x4 - core index']
  #allocation1 [shape = 'u32[144,128]{1,0:T(1,128)}', space=vmem, size = 0x12000, scoped, tag = 'internal scratch']
  #allocation2 [shape = 'f32[1]{0:T(128)S(6)}', space=smem, size = 0x200, scoped, tag = 'scoped memory for tpu_custom_call.1']
  %s0 = inlined_call_operand.<no memory space> [shape: f32[1], index: 0, kind: input, shape index: {}]
  %s1 = inlined_call_operand.hbm [shape: f32[16,128], index: 1, kind: input, shape index: {}]
  %s2 = inlined_call_operand.hbm [shape: f32[16,128], index: 2, kind: output, shape index: {}]
  %s3 = sld [smem:[#allocation0]]
  $region22: #{tpu_custom_call.1} parent=0
    _
  %s5 = ssub.s32 1, %s3
  %s6 = scalar_select 0, %s5, %s3
  %7 = sst [smem:[#allocation2]] %s0
  $region1: #{tpu_custom_call.1} parent=0
    #allocation3 [shape = 'u8[8192]{0}', space=vmem, size = 0x2000, scoped, tag = 'input window, operand 1, single buffered']
    #allocation4 [shape = 's32[1]{0}', space=sflag, size = 0x4, scoped, tag = 'scoped memory for tpu_custom_call.1']
    #allocation5 [shape = 's32[1]{0}', space=sflag, size = 0x4, scoped, tag = 'scoped memory for tpu_custom_call.1']
    #allocation6 [shape = 'u8[8192]{0}', space=vmem, size = 0x2000, scoped, tag = 'output window, operand 0, single buffered']
    %8 = vsyncpa [#allocation4], 0
    %9 = vsyncpa [#allocation5], 0
    // Predicated region
    $region2: #{tpu_custom_call.1} parent=1 // pred_check
      _
    $region3: #{tpu_custom_call.1} parent=1 // pred_check_branch
      %11 = sbr.rel (0) target = $region5
    $region4: #{tpu_custom_call.1} parent=1 // pred_region
      _
    $region5: #{tpu_custom_call.1} parent=1 // pred_fallthru
      _
    // Predicated region
    $region6: #{tpu_custom_call.1} parent=1 // pred_check
      _
    $region7: #{tpu_custom_call.1} parent=1 // pred_check_branch
      %13 = sbr.rel (0) target = $region9
    $region8: #{tpu_custom_call.1} parent=1 // pred_region
      %s15 = ssub.s32 256, 256
      %16 = vsyncadd [#allocation4], %s15
      %s17 = sshll.u32 [#allocation3], 4
      %s18 = int_to_ptr.vmem [resolvable:$true] %s17
      %23 = dma.hbm_to_vmem [thread:$0]  %s1, 256, %s18, [#allocation4], 128, 128, 8
    $region9: #{tpu_custom_call.1} parent=1 // pred_fallthru
      _
    // Predicated region
    $region10: #{tpu_custom_call.1} parent=1 // pred_check
      _
    $region11: #{tpu_custom_call.1} parent=1 // pred_check_branch
      %25 = sbr.rel (0) target = $region13
    $region12: #{tpu_custom_call.1} parent=1 // pred_region
      %26 = dma.done [#allocation4], 256
    $region13: #{tpu_custom_call.1} parent=1 // pred_fallthru
      _
    %v27 = vld [vmem:[#allocation3] sm:$0xff]
    %v28 = vld [vmem:[#allocation3 + $0x8] sm:$0xff]
    %s29 = sld [smem:[#allocation2]]
    %v30 = vstv %s29
    %v31 = vmul.f32 %v27, %v30
    %v32 = vmul.f32 %v28, %v30
    %33 = vst [vmem:[#allocation6] sm:$0xff] %v31
    %34 = vst [vmem:[#allocation6 + $0x8] sm:$0xff] %v32
    // Predicated region
    $region14: #{tpu_custom_call.1} parent=1 // pred_check
      _
    $region15: #{tpu_custom_call.1} parent=1 // pred_check_branch
      %36 = sbr.rel (0) target = $region17
    $region16: #{tpu_custom_call.1} parent=1 // pred_region
      %s38 = ssub.s32 256, 256
      %39 = vsyncadd [#allocation5], %s38
      %s40 = sshll.u32 [#allocation6], 4
      %s41 = int_to_ptr.vmem [resolvable:$true] %s40
      %46 = dma.vmem_to_hbm [thread:$0]  %s41, 256, %s2, [#allocation5], 128, 128, 8
    $region17: #{tpu_custom_call.1} parent=1 // pred_fallthru
      _
    // Predicated region
    $region18: #{tpu_custom_call.1} parent=1 // pred_check
      _
    $region19: #{tpu_custom_call.1} parent=1 // pred_check_branch
      %48 = sbr.rel (0) target = $region21
    $region20: #{tpu_custom_call.1} parent=1 // pred_region
      %49 = dma.done [#allocation5], 256
    $region21: #{tpu_custom_call.1} parent=1 // pred_fallthru
      _
    %50 = vsyncpa [#allocation4], 1
    %51 = vsyncpa [#allocation5], 1

</llo_original>
